<compile_context>
chip_gen: v5e
topology: v5e:2x2
jax: 0.10.0
libtpu: 0.0.40
codegen_flags: <defaults>
</compile_context>

<pallas_src>
import jax
import jax.numpy as jnp
from jax.experimental import pallas as pl
from jax.experimental.pallas import tpu as pltpu


def _round_up(x, m):
    return ((x + m - 1) // m) * m


def _partial_patch_embed_kernel(a_ref, s_ref, w_ref, b_ref, o_ref):
    # a_ref : (TM, K)   masked patch rows (compute dtype, e.g. bf16)
    # s_ref : (TM, 2)   f32 [mask_ratio (already * update_mask), update_mask]
    # w_ref : (K, Ep)   conv weight as matmul operand (compute dtype)
    # b_ref : (1, Ep)   f32 conv bias
    # o_ref : (TM, Ep)  output rows
    raw = jnp.dot(a_ref[...], w_ref[...], preferred_element_type=jnp.float32)
    s = s_ref[...]
    ratio = s[:, 0:1]
    um = s[:, 1:2]
    # PartialConv2d: ((raw+bias) - bias) * ratio + bias, then * update_mask
    o_ref[...] = ((raw * ratio + b_ref[...]) * um).astype(o_ref.dtype)


def _vmem_budget_bytes(tm, K, Ep, in_bytes, out_bytes):
    # Rough VMEM footprint of the pipelined buffers (lane/sublane padded).
    k_lanes = _round_up(max(K, 1), 128)
    a = tm * k_lanes * in_bytes * 2          # patch blocks, double buffered
    s = tm * 128 * 4 * 2                     # (tm, 2) f32 lane-pads to 128
    w = _round_up(max(K, 1), 8) * Ep * in_bytes  # weight, single buffered
    b = 8 * Ep * 4                           # bias block (sublane padded)
    o = tm * Ep * out_bytes * 2              # output blocks, double buffered
    acc = tm * Ep * 4                        # f32 matmul result temp
    return a + s + w + b + o + acc


def patial_patch_embed(x, weight, bias, mask=None, *, patch_size,
                       tm=512, compute_dtype=jnp.bfloat16, out_dtype=None):
    """x: (B, C, H, W) NCHW.  weight: (E, C, P, P).  bias: (E,).  mask: (1,1,H,W) or None."""
    B, C, H, W = x.shape
    P = patch_size
    E = weight.shape[0]
    Hp, Wp = H // P, W // P
    num_patches = Hp * Wp
    K = C * P * P
    M = B * num_patches
    slide_winsize = float(P * P)  # mask kernel is (1,1,P,P) of ones
    out_dtype = x.dtype if out_dtype is None else out_dtype

    if mask is None:
        mask = jnp.ones((1, 1, H, W), x.dtype)
    if mask.shape != (1, 1, H, W):
        # TODO(synk): per-channel masks (1, C, H, W) are not supported (the
        # reference PartialConv2d here only uses a single-channel mask).
        raise ValueError(f"mask must have shape (1, 1, {H}, {W}), got {mask.shape}")

    # ---- partial-conv mask statistics: tiny per-patch (M, 2) f32 side input ----
    mp = (mask.astype(jnp.float32).reshape(Hp, P, Wp, P)
              .transpose(0, 2, 1, 3)                      # (Hp, Wp, P, P)
              .reshape(num_patches, P * P))
    msum = mp.sum(axis=-1, keepdims=True)                 # conv(mask, ones) per patch
    um = jnp.clip(msum, 0.0, 1.0)                         # update_mask
    ratio = (slide_winsize / (msum + 1e-8)) * um          # mask_ratio
    scale = jnp.concatenate([ratio, um], axis=-1)         # (num_patches, 2)
    scale_rows = jnp.broadcast_to(scale[None], (B, num_patches, 2)).reshape(M, 2)

    # ---- masked patchify (x*mask fused here); element order (C, kh, kw) matches torch ----
    xm = x * mask
    xp = (xm.reshape(B, C, Hp, P, Wp, P)
            .transpose(0, 2, 4, 1, 3, 5)                  # (B, Hp, Wp, C, P, P)
            .reshape(M, K)
            .astype(compute_dtype))                       # cast BEFORE pad: bf16 in HBM

    w_mat = weight.reshape(E, K).T.astype(compute_dtype)  # (K, E)
    b_row = bias.reshape(1, E).astype(jnp.float32)

    # ---- lane-dense output padding (E only; K stays unpadded) + tile sizing ----
    Ep = _round_up(E, 128)
    tm = max(16, _round_up(tm, 16))                       # bf16 sublane packing
    tm = min(tm, _round_up(M, 16))                        # don't over-pad tiny problems
    Mp = _round_up(M, tm)

    xp = jnp.pad(xp, ((0, Mp - M), (0, 0)))
    scale_rows = jnp.pad(scale_rows, ((0, Mp - M), (0, 0)))
    w_mat = jnp.pad(w_mat, ((0, 0), (0, Ep - E)))
    b_row = jnp.pad(b_row, ((0, 0), (0, Ep - E)))

    in_bytes = jnp.dtype(compute_dtype).itemsize
    out_bytes = jnp.dtype(out_dtype).itemsize
    vmem_limit = int(min(64 << 20,
                         max(32 << 20,
                             int(1.5 * _vmem_budget_bytes(tm, K, Ep, in_bytes, out_bytes)))))

    cost = pl.CostEstimate(
        flops=2 * Mp * K * Ep,
        transcendentals=0,
        bytes_accessed=(Mp * K * in_bytes + Mp * 2 * 4
                        + K * Ep * in_bytes + Ep * 4
                        + Mp * Ep * out_bytes))

    grid = (Mp // tm,)

    out = pl.pallas_call(
        _partial_patch_embed_kernel,
        out_shape=jax.ShapeDtypeStruct((Mp, Ep), out_dtype),
        grid_spec=pltpu.PrefetchScalarGridSpec(
            num_scalar_prefetch=0,
            grid=grid,
            in_specs=[
                pl.BlockSpec((tm, K), lambda i: (i, 0)),            # masked patches
                pl.BlockSpec((tm, 2), lambda i: (i, 0)),            # [ratio, update_mask]
                pl.BlockSpec((K, Ep), lambda i: (0, 0),
                             pipeline_mode=pl.Buffered(1)),         # weight (constant)
                pl.BlockSpec((1, Ep), lambda i: (0, 0),
                             pipeline_mode=pl.Buffered(1)),         # bias   (constant)
            ],
            out_specs=pl.BlockSpec((tm, Ep), lambda i: (i, 0)),
        ),
        compiler_params=pltpu.CompilerParams(
            dimension_semantics=("parallel",),
            vmem_limit_bytes=vmem_limit),
        cost_estimate=cost,
    )(xp, scale_rows, w_mat, b_row)

    # strip padding; (B*num_patches, E) -> (B, num_patches, E) == flatten(2).transpose(1,2)
    return out[:M, :E].reshape(B, num_patches, E)


def _reference(x, weight, bias, mask, patch_size):
    """Pure-JAX f32 reference mirroring PartialConv2d + PatialPatchEmbed forward."""
    B, C, H, W = x.shape
    P = patch_size
    E = weight.shape[0]
    Hp, Wp = H // P, W // P
    num_patches = Hp * Wp
    K = C * P * P
    slide_winsize = float(P * P)

    xm = x * mask
    xp = xm.reshape(B, C, Hp, P, Wp, P).transpose(0, 2, 4, 1, 3, 5).reshape(B * num_patches, K)
    raw = xp @ weight.reshape(E, K).T + bias[None, :]          # raw_out incl. bias

    mp = mask.reshape(Hp, P, Wp, P).transpose(0, 2, 1, 3).reshape(num_patches, P * P)
    msum = mp.sum(axis=-1, keepdims=True)
    ratio = slide_winsize / (msum + 1e-8)
    um = jnp.clip(msum, 0.0, 1.0)
    ratio = ratio * um
    ratio_full = jnp.broadcast_to(ratio[None], (B, num_patches, 1)).reshape(B * num_patches, 1)
    um_full = jnp.broadcast_to(um[None], (B, num_patches, 1)).reshape(B * num_patches, 1)

    out = ((raw - bias[None, :]) * ratio_full + bias[None, :]) * um_full
    return out.reshape(B, num_patches, E)


if __name__ == "__main__":
    # small config consistent with the module: img 16x16, patch 4, 4 chans, 32-dim embed
    B, C, H, W = 2, 4, 16, 16
    P = 4
    E = 32

    key = jax.random.PRNGKey(0)
    kx, kw, kb, km = jax.random.split(key, 4)

    x = jax.random.normal(kx, (B, C, H, W), dtype=jnp.float32)
    weight = jax.random.normal(kw, (E, C, P, P), dtype=jnp.float32) * 0.05
    bias = jax.random.normal(kb, (E,), dtype=jnp.float32) * 0.05
    # binary mask with some holes (exercises the partial-conv renormalization)
    mask = (jax.random.uniform(km, (1, 1, H, W)) > 0.3).astype(jnp.float32)

    out = patial_patch_embed(x, weight, bias, mask, patch_size=P)
    out = jax.block_until_ready(out)

    ref = _reference(x, weight, bias, mask, P)
    assert out.shape == (B, (H // P) * (W // P), E)
    # bf16 MXU operands vs f32 reference -> loosened tolerance
    assert jnp.allclose(out, ref, atol=5e-2, rtol=5e-2), "mismatch vs reference"

    # also exercise the mask=None path and bf16-output path once
    out2 = jax.block_until_ready(
        patial_patch_embed(x, weight, bias, None, patch_size=P, out_dtype=jnp.bfloat16))
    ref2 = _reference(x, weight, bias, jnp.ones((1, 1, H, W), jnp.float32), P)
    assert jnp.allclose(out2.astype(jnp.float32), ref2, atol=5e-2, rtol=5e-2)

    print("KERNEL_OK")
</pallas_src>

<mosaic_0001>
module attributes {stable_mosaic.version = 11 : i64} {
  func.func @_partial_patch_embed_kernel(%arg0: i32, %arg1: memref<32x64xbf16, #tpu.memory_space<vmem>>, %arg2: memref<32x2xf32, #tpu.memory_space<vmem>>, %arg3: memref<64x128xbf16, #tpu.memory_space<vmem>>, %arg4: memref<1x128xf32, #tpu.memory_space<vmem>>, %arg5: memref<32x128xf32, #tpu.memory_space<vmem>>) attributes {dimension_semantics = [#tpu.dimension_semantics<parallel>], iteration_bounds = array<i64: 1>, scalar_prefetch = 0 : i64, scratch_operands = 0 : i64, tpu.core_type = #tpu.core_type<tc>, window_params = [{transform_indices = @transform_0, window_bounds = array<i64: 32, 64>}, {transform_indices = @transform_1, window_bounds = array<i64: 32, 2>}, {pipeline_mode = #tpu.pipeline_mode<synchronous>, transform_indices = @transform_2, window_bounds = array<i64: 64, 128>}, {pipeline_mode = #tpu.pipeline_mode<synchronous>, transform_indices = @transform_3, window_bounds = array<i64: 1, 128>}, {transform_indices = @transform_4, window_bounds = array<i64: 32, 128>}]} {
    %c0 = arith.constant 0 : index
    %c0_0 = arith.constant 0 : index
    %0 = vector.load %arg1[%c0, %c0_0] : memref<32x64xbf16, #tpu.memory_space<vmem>>, vector<32x64xbf16>
    %c0_1 = arith.constant 0 : index
    %c0_2 = arith.constant 0 : index
    %1 = vector.load %arg3[%c0_1, %c0_2] : memref<64x128xbf16, #tpu.memory_space<vmem>>, vector<64x128xbf16>
    %cst = arith.constant dense<0.000000e+00> : vector<32x128xf32>
    %2 = tpu.matmul %0, %1, %cst {dimension_numbers = #tpu.dot_dimension_numbers<[1], [0], [0], [1], [0, 0, 1, 1], [], []>} : vector<32x64xbf16>, vector<64x128xbf16>, vector<32x128xf32> -> vector<32x128xf32>
    %c0_3 = arith.constant 0 : index
    %c0_4 = arith.constant 0 : index
    %3 = vector.load %arg2[%c0_3, %c0_4] : memref<32x2xf32, #tpu.memory_space<vmem>>, vector<32x2xf32>
    %4 = vector.extract_strided_slice %3 {offsets = [0, 0], sizes = [32, 1], strides = [1, 1]} : vector<32x2xf32> to vector<32x1xf32>
    %5 = vector.extract_strided_slice %3 {offsets = [0, 1], sizes = [32, 1], strides = [1, 1]} : vector<32x2xf32> to vector<32x1xf32>
    %6 = vector.broadcast %4 : vector<32x1xf32> to vector<32x128xf32>
    %7 = arith.mulf %2, %6 : vector<32x128xf32>
    %c0_5 = arith.constant 0 : index
    %c0_6 = arith.constant 0 : index
    %8 = vector.load %arg4[%c0_5, %c0_6] : memref<1x128xf32, #tpu.memory_space<vmem>>, vector<1x128xf32>
    %9 = vector.broadcast %8 : vector<1x128xf32> to vector<32x128xf32>
    %10 = arith.addf %7, %9 : vector<32x128xf32>
    %11 = vector.broadcast %5 : vector<32x1xf32> to vector<32x128xf32>
    %12 = arith.mulf %10, %11 : vector<32x128xf32>
    %c0_7 = arith.constant 0 : index
    %c0_8 = arith.constant 0 : index
    %13 = vector.load %arg5[%c0_7, %c0_8] : memref<32x128xf32, #tpu.memory_space<vmem>>, vector<32x128xf32>
    tpu.vector_store %arg5[%c0_7, %c0_8], %12 {strides = array<i32>} : memref<32x128xf32, #tpu.memory_space<vmem>>, vector<32x128xf32>,
    return
  }
  func.func @transform_0(%arg0: i32) -> (i32, i32) {
    %c0_i32 = arith.constant 0 : i32
    %c0_i32_0 = arith.constant 0 : i32
    return %arg0, %c0_i32 : i32, i32
  }
  func.func @transform_1(%arg0: i32) -> (i32, i32) {
    %c0_i32 = arith.constant 0 : i32
    %c0_i32_0 = arith.constant 0 : i32
    return %arg0, %c0_i32 : i32, i32
  }
  func.func @transform_2(%arg0: i32) -> (i32, i32) {
    %c0_i32 = arith.constant 0 : i32
    %c0_i32_0 = arith.constant 0 : i32
    %c0_i32_1 = arith.constant 0 : i32
    return %c0_i32, %c0_i32_0 : i32, i32
  }
  func.func @transform_3(%arg0: i32) -> (i32, i32) {
    %c0_i32 = arith.constant 0 : i32
    %c0_i32_0 = arith.constant 0 : i32
    %c0_i32_1 = arith.constant 0 : i32
    return %c0_i32, %c0_i32_0 : i32, i32
  }
  func.func @transform_4(%arg0: i32) -> (i32, i32) {
    %c0_i32 = arith.constant 0 : i32
    %c0_i32_0 = arith.constant 0 : i32
    return %arg0, %c0_i32 : i32, i32
  }
}

</mosaic_0001>

<llo_original>
// kernel: tpu_custom_call.1
$region0: #{tpu_custom_call.1}
  #allocation0 [shape = 'u32[]', space=smem, size = 0x4, offset = 0x4, fixed_abs, tag = 'smem constant byte address 0x4 - core index']
  #allocation1 [shape = 'u32[72,128]{1,0:T(1,128)}', space=vmem, size = 0x9000, scoped, tag = 'internal scratch']
  %s0 = inlined_call_operand.hbm [shape: bf16[32,64], index: 0, kind: input, shape index: {}]
  %s1 = inlined_call_operand.vmem [shape: f32[32,2], index: 1, kind: input, shape index: {}]
  %s2 = inlined_call_operand.vmem [shape: bf16[64,128], index: 2, kind: input, shape index: {}]
  %s3 = inlined_call_operand.vmem [shape: f32[1,128], index: 3, kind: input, shape index: {}]
  %s4 = inlined_call_operand.hbm [shape: f32[32,128], index: 4, kind: output, shape index: {}]
  %s5 = sld [smem:[#allocation0]]
  $region30: #{tpu_custom_call.1} parent=0
    _
  %s7 = ssub.s32 1, %s5
  %s8 = scalar_select 0, %s7, %s5
  $region1: #{tpu_custom_call.1} parent=0
    #allocation2 [shape = 'u8[8192]{0}', space=vmem, size = 0x2000, scoped, tag = 'input window, operand 0, single buffered']
    #allocation3 [shape = 's32[1]{0}', space=sflag, size = 0x4, scoped, tag = 'scoped memory for tpu_custom_call.1']
    #allocation4 [shape = 's32[1]{0}', space=sflag, size = 0x4, scoped, tag = 'scoped memory for tpu_custom_call.1']
    #allocation5 [shape = 'u8[16384]{0}', space=vmem, size = 0x4000, scoped, tag = 'output window, operand 0, single buffered']
    %9 = vsyncpa [#allocation3], 0
    %10 = vsyncpa [#allocation4], 0
    // Predicated region
    $region2: #{tpu_custom_call.1} parent=1 // pred_check
      _
    $region3: #{tpu_custom_call.1} parent=1 // pred_check_branch
      %12 = sbr.rel (0) target = $region5
    $region4: #{tpu_custom_call.1} parent=1 // pred_region
      %14 = vsyncadd [#allocation3], 0
      %s15 = sshll.u32 %s0, 4
      %s16 = int_to_ptr.hbm [resolvable:$true] %s15
      %s17 = sshll.u32 [#allocation2], 4
      %s18 = int_to_ptr.vmem [resolvable:$true] %s17
      %23 = dma.hbm_to_vmem [thread:$0]  %s16, 256, %s18, [#allocation3], 64, 64, 4
    $region5: #{tpu_custom_call.1} parent=1 // pred_fallthru
      _
    // Predicated region
    $region6: #{tpu_custom_call.1} parent=1 // pred_check
      _
    $region7: #{tpu_custom_call.1} parent=1 // pred_check_branch
      %25 = sbr.rel (0) target = $region9
    $region8: #{tpu_custom_call.1} parent=1 // pred_region
      _
    $region9: #{tpu_custom_call.1} parent=1 // pred_fallthru
      _
    // Predicated region
    $region10: #{tpu_custom_call.1} parent=1 // pred_check
      _
    $region11: #{tpu_custom_call.1} parent=1 // pred_check_branch
      %27 = sbr.rel (0) target = $region13
    $region12: #{tpu_custom_call.1} parent=1 // pred_region
      _
    $region13: #{tpu_custom_call.1} parent=1 // pred_fallthru
      _
    // Predicated region
    $region14: #{tpu_custom_call.1} parent=1 // pred_check
      _
    $region15: #{tpu_custom_call.1} parent=1 // pred_check_branch
      %29 = sbr.rel (0) target = $region17
    $region16: #{tpu_custom_call.1} parent=1 // pred_region
      _
    $region17: #{tpu_custom_call.1} parent=1 // pred_fallthru
      _
    // Predicated region
    $region18: #{tpu_custom_call.1} parent=1 // pred_check
      _
    $region19: #{tpu_custom_call.1} parent=1 // pred_check_branch
      %31 = sbr.rel (0) target = $region21
    $region20: #{tpu_custom_call.1} parent=1 // pred_region
      %33 = dma.done [#allocation3], 256
    $region21: #{tpu_custom_call.1} parent=1 // pred_fallthru
      _
    %v35 = vld [vmem:[#allocation2] sm:$0xf]
    %v36 = vld [vmem:[#allocation2 + $0x4] sm:$0xf]
    %v37 = vld [vmem:[#allocation2 + $0x8] sm:$0xf]
    %v38 = vld [vmem:[#allocation2 + $0xc] sm:$0xf]
    %v39 = vld [vmem:[%s2] sm:$0xf]
    %v40 = vld [vmem:[%s2 + $0x4] sm:$0xf]
    %v41 = vld [vmem:[%s2 + $0x8] sm:$0xf]
    %v42 = vld [vmem:[%s2 + $0xc] sm:$0xf]
    %v43 = vld [vmem:[%s2 + $0x10] sm:$0xf]
    %v44 = vld [vmem:[%s2 + $0x14] sm:$0xf]
    %v45 = vld [vmem:[%s2 + $0x18] sm:$0xf]
    %v46 = vld [vmem:[%s2 + $0x1c] sm:$0xf]
    %v51 = vunpack.c.l.b16 %v35
    %v52 = vunpack.c.l.b16 %v36
    %v53 = vunpack.c.l.b16 %v37
    %v54 = vunpack.c.l.b16 %v38
    %v55 = vpack.c.b16 %v52, %v51
    %v56 = vpack.c.b16 %v54, %v53
    %v65 = vunpack.c.l.b16 %v39
    %v66 = vunpack.c.l.b16 %v40
    %v67 = vunpack.c.l.b16 %v41
    %v68 = vunpack.c.l.b16 %v42
    %v69 = vunpack.c.l.b16 %v43
    %v70 = vunpack.c.l.b16 %v44
    %v71 = vunpack.c.l.b16 %v45
    %v72 = vunpack.c.l.b16 %v46
    %v73 = vpack.c.b16 %v66, %v65
    %v74 = vpack.c.b16 %v68, %v67
    %v75 = vpack.c.b16 %v70, %v69
    %v76 = vpack.c.b16 %v72, %v71
    %vm81 = vcmask 523264
    %v83 = vsel %vm81, %v55, 0
    %v86 = vsel %vm81, %v56, 0
    %88 = vmatpush.bf16.msra.mxu0 0
    %89 = vmatpush.bf16.msra.mxu0 0
    %90 = vmatpush.bf16.msra.mxu0 0
    %91 = vmatpush.bf16.msra.mxu0 0
    %92 = vmatpush.bf16.msra.mxu0 %v76
    %93 = vmatpush.bf16.msra.mxu0 %v75
    %94 = vmatpush.bf16.msra.mxu0 %v74
    %95 = vmatpush.bf16.msra.mxu0 %v73
    %96 = vmatmul.bf16.gmra.mxu0 %v83
    %v97 = vpop.f32.mrf.mxu0
    %v98 = vadd.f32 0.0, %v97
    %v99 = vpop.f32.mrf.mxu0
    %v100 = vadd.f32 0.0, %v99
    %101 = vmatmul.bf16.gmra.mxu0 %v86
    %v102 = vpop.f32.mrf.mxu0
    %v103 = vadd.f32 0.0, %v102
    %v104 = vpop.f32.mrf.mxu0
    %v105 = vadd.f32 0.0, %v104
    %106 = vdwg.mxu0
    %v107 = vld [vmem:[%s1] sm:$0xff]
    %v108 = vld [vmem:[%s1 + $0x8] sm:$0xff]
    %v109 = vld [vmem:[%s1 + $0x10] sm:$0xff]
    %v110 = vld [vmem:[%s1 + $0x18] sm:$0xff]
    %112 = vset.pattern.permute.xlu0 0
    %113 = vperm.xlu0 %112, %v107
    %v114 = vpop.permute.xlu0 %113
    %117 = vset.pattern.permute.xlu0 0
    %118 = vperm.xlu0 %117, %v108
    %v119 = vpop.permute.xlu0 %118
    %122 = vset.pattern.permute.xlu0 0
    %123 = vperm.xlu0 %122, %v109
    %v124 = vpop.permute.xlu0 %123
    %127 = vset.pattern.permute.xlu0 0
    %128 = vperm.xlu0 %127, %v110
    %v129 = vpop.permute.xlu0 %128
    %v131 = vmul.f32 %v98, %v114
    %v132 = vmul.f32 %v100, %v119
    %v133 = vmul.f32 %v103, %v124
    %v134 = vmul.f32 %v105, %v129
    %v135 = vld [vmem:[%s3] sm:$0x1]
    %v137 = vperm.slane %v135, 0
    %v139 = vadd.f32 %v131, %v137
    %v140 = vadd.f32 %v132, %v137
    %v141 = vadd.f32 %v133, %v137
    %v142 = vadd.f32 %v134, %v137
    %143 = vset.pattern.permute.xlu0 1
    %144 = vperm.xlu0 %143, %v107
    %v145 = vpop.permute.xlu0 %144
    %147 = vset.pattern.permute.xlu0 1
    %148 = vperm.xlu0 %147, %v108
    %v149 = vpop.permute.xlu0 %148
    %151 = vset.pattern.permute.xlu0 1
    %152 = vperm.xlu0 %151, %v109
    %v153 = vpop.permute.xlu0 %152
    %155 = vset.pattern.permute.xlu0 1
    %156 = vperm.xlu0 %155, %v110
    %v157 = vpop.permute.xlu0 %156
    %v159 = vmul.f32 %v139, %v145
    %v160 = vmul.f32 %v140, %v149
    %v161 = vmul.f32 %v141, %v153
    %v162 = vmul.f32 %v142, %v157
    %163 = vst [vmem:[#allocation5] sm:$0xff] %v159
    %164 = vst [vmem:[#allocation5 + $0x8] sm:$0xff] %v160
    %165 = vst [vmem:[#allocation5 + $0x10] sm:$0xff] %v161
    %166 = vst [vmem:[#allocation5 + $0x18] sm:$0xff] %v162
    // Predicated region
    $region22: #{tpu_custom_call.1} parent=1 // pred_check
      _
    $region23: #{tpu_custom_call.1} parent=1 // pred_check_branch
      %168 = sbr.rel (0) target = $region25
    $region24: #{tpu_custom_call.1} parent=1 // pred_region
      %170 = vsyncadd [#allocation4], 0
      %s171 = sshll.u32 [#allocation5], 4
      %s172 = int_to_ptr.vmem [resolvable:$true] %s171
      %s173 = sshll.u32 %s4, 4
      %s174 = int_to_ptr.hbm [resolvable:$true] %s173
      %179 = dma.vmem_to_hbm [thread:$0]  %s172, 512, %s174, [#allocation4], 128, 128, 8
    $region25: #{tpu_custom_call.1} parent=1 // pred_fallthru
      _
    // Predicated region
    $region26: #{tpu_custom_call.1} parent=1 // pred_check
      _
    $region27: #{tpu_custom_call.1} parent=1 // pred_check_branch
      %181 = sbr.rel (0) target = $region29
    $region28: #{tpu_custom_call.1} parent=1 // pred_region
      %183 = dma.done [#allocation4], 512
    $region29: #{tpu_custom_call.1} parent=1 // pred_fallthru
      _
    %184 = vsyncpa [#allocation3], 1
    %185 = vsyncpa [#allocation4], 1

</llo_original>
